<compile_context>
chip_gen: v7x
topology: tpu7x:2x2x1
jax: 0.10.0
libtpu: 0.0.40
codegen_flags: <defaults>
</compile_context>

<pallas_src>
import functools
import math

import jax
import jax.numpy as jnp
from jax import lax
from jax.experimental import pallas as pl
from jax.experimental.pallas import tpu as pltpu

_MIB = 1024 * 1024


def _gelu(h, approximate):
    if approximate:
        # tanh-form GELU: transcendental goes to the EUP slot (v6e/v7x win when
        # the exact-erf f32 VALU chain would otherwise bind).  Off by default.
        return jax.nn.gelu(h, approximate=True)
    # exact erf GELU == nn.GELU() default (approximate='none')
    return 0.5 * h * (1.0 + lax.erf(h * (1.0 / math.sqrt(2.0))))


def _mlp_fused_kernel(x_ref, w1_ref, b1_ref, w2_ref, b2_ref, o_ref, *,
                      approximate):
    # x is cast to the matmul dtype here (no separate HBM cast pass outside).
    x = x_ref[...].astype(w1_ref.dtype)
    h = jnp.dot(x, w1_ref[...], preferred_element_type=jnp.float32) + b1_ref[...]
    h = _gelu(h, approximate)
    out = jnp.dot(h.astype(w2_ref.dtype), w2_ref[...],
                  preferred_element_type=jnp.float32) + b2_ref[...]
    o_ref[...] = out.astype(o_ref.dtype)


def _mlp_htiled_kernel(x_ref, w1_ref, b1_ref, w2_ref, b2_ref, o_ref, acc_ref, *,
                       approximate):
    # Grid = (row tiles, hidden chunks).  W1/W2 are streamed in (E, th)/(th, E)
    # slices (never fully VMEM-resident) and the f32 hidden is capped at
    # (tm, th); the output accumulates in an f32 scratch across the H axis.
    h_idx = pl.program_id(1)

    @pl.when(h_idx == 0)
    def _():
        acc_ref[...] = jnp.zeros_like(acc_ref)

    x = x_ref[...].astype(w1_ref.dtype)
    h = jnp.dot(x, w1_ref[...], preferred_element_type=jnp.float32) + b1_ref[...]
    h = _gelu(h, approximate)
    acc_ref[...] += jnp.dot(h.astype(w2_ref.dtype), w2_ref[...],
                            preferred_element_type=jnp.float32)

    @pl.when(h_idx == pl.num_programs(1) - 1)
    def _():
        o_ref[...] = (acc_ref[...] + b2_ref[...]).astype(o_ref.dtype)


def _round_up(x, m):
    return ((x + m - 1) // m) * m


def _choose_row_tile(m, tm_req):
    if m <= 128:
        return m                          # single tile; block == full row extent
    if m <= 2 * tm_req:
        # Guarantee >= 2 grid steps so both v7x TensorCores get work.
        return _round_up(pl.cdiv(m, 2), 8)
    return tm_req                         # default 512: multiple of 8 and 128


def _vmem_capacity_bytes():
    try:
        return int(pltpu.get_tpu_info().vmem_capacity_bytes)
    except Exception:
        return 128 * _MIB                 # v5e/v6e default if the query fails


def prepare_mlp_params(w1, b1, w2, b2, compute_dtype=jnp.bfloat16):
    """One-time parameter prep (call OUTSIDE the jitted forward): cast weights
    to the matmul dtype and reshape biases to (1, N) rows so the per-call
    forward emits no extra HBM cast/reshape passes."""
    return (jnp.asarray(w1, compute_dtype),
            jnp.asarray(b1, jnp.float32).reshape(1, -1),
            jnp.asarray(w2, compute_dtype),
            jnp.asarray(b2, jnp.float32).reshape(1, -1))


def mlp_pallas(x, w1, b1, w2, b2, *, tm=512, compute_dtype=jnp.bfloat16,
               out_dtype=None, gelu_approx=False, h_tile=None):
    """x: [..., E].  w1: [E, H], b1: [H]|[1,H], w2: [H, E], b2: [E]|[1,E].
    Pass params through prepare_mlp_params() once for zero per-call prep."""
    orig_shape = x.shape
    E = orig_shape[-1]
    H = w1.shape[-1]
    M = math.prod(orig_shape[:-1])
    out_dtype = x.dtype if out_dtype is None else jnp.dtype(out_dtype)
    cbytes = jnp.dtype(compute_dtype).itemsize

    # These are no-ops (elided by XLA) when params were prepared ahead of time.
    w1 = jnp.asarray(w1, compute_dtype)
    w2 = jnp.asarray(w2, compute_dtype)
    b1 = jnp.asarray(b1, jnp.float32).reshape(1, H)
    b2 = jnp.asarray(b2, jnp.float32).reshape(1, E)

    x2d = x.reshape(M, E)                 # layout no-op for a [..., E] tensor

    tm_eff = _choose_row_tile(M, tm)
    grid_m = pl.cdiv(M, tm_eff)           # trailing partial row-tile is masked

    vmem_cap = _vmem_capacity_bytes()

    # Path selection: fully fused (weights resident) vs. H-tiled accumulator
    # (weight slices streamed).  Residency threshold scales with chip VMEM, so
    # it kicks in ~2x earlier on v7x (64 MiB) than on v5e/v6e (128 MiB).
    if h_tile is None:
        resident_w = 2 * E * H * cbytes
        fused_hidden = tm_eff * H * (4 + cbytes)
        if H % 128 == 0 and (resident_w > vmem_cap // 3
                             or fused_hidden > 4 * _MIB):
            for th in (512, 256, 128):
                if H % th == 0:
                    h_tile = th
                    break
    elif H % h_tile != 0:
        raise ValueError(f"h_tile={h_tile} must divide hidden dim H={H}")

    out_bytes = jnp.dtype(out_dtype).itemsize
    x_bytes = jnp.dtype(x.dtype).itemsize

    if h_tile is None:
        kernel = functools.partial(_mlp_fused_kernel, approximate=gelu_approx)
        grid = (grid_m,)
        in_specs = [
            pl.BlockSpec((tm_eff, E), lambda i: (i, 0)),    # x rows (streamed)
            pl.BlockSpec((E, H), lambda i: (0, 0)),         # W1 (resident)
            pl.BlockSpec((1, H), lambda i: (0, 0)),         # b1
            pl.BlockSpec((H, E), lambda i: (0, 0)),         # W2 (resident)
            pl.BlockSpec((1, E), lambda i: (0, 0)),         # b2
        ]
        out_specs = pl.BlockSpec((tm_eff, E), lambda i: (i, 0))
        scratch_shapes = []
        dim_sem = ("parallel",)
        est = (2 * 2 * E * H * cbytes + 2 * (H + E) * 4     # weights + biases
               + 2 * tm_eff * E * x_bytes                   # x tiles (dbl-buf)
               + 2 * tm_eff * E * out_bytes                 # out tiles
               + tm_eff * E * (cbytes + 4)                  # x cast + f32 out
               + tm_eff * H * (4 + cbytes))                 # f32 hidden + recast
        w_traffic = 2 * E * H * cbytes + (H + E) * 4        # read once
    else:
        kernel = functools.partial(_mlp_htiled_kernel, approximate=gelu_approx)
        grid = (grid_m, H // h_tile)
        in_specs = [
            pl.BlockSpec((tm_eff, E), lambda i, h: (i, 0)),   # x (resident over h)
            pl.BlockSpec((E, h_tile), lambda i, h: (0, h)),   # W1 slice (streamed)
            pl.BlockSpec((1, h_tile), lambda i, h: (0, h)),   # b1 slice
            pl.BlockSpec((h_tile, E), lambda i, h: (h, 0)),   # W2 slice (streamed)
            pl.BlockSpec((1, E), lambda i, h: (0, 0)),        # b2
        ]
        out_specs = pl.BlockSpec((tm_eff, E), lambda i, h: (i, 0))
        scratch_shapes = [pltpu.VMEM((tm_eff, E), jnp.float32)]  # f32 accumulator
        dim_sem = ("parallel", "arbitrary")
        est = (2 * 2 * E * h_tile * cbytes + 2 * h_tile * 4 + E * 4
               + 2 * tm_eff * E * x_bytes
               + 2 * tm_eff * E * out_bytes
               + tm_eff * E * (cbytes + 4)                  # x cast + accumulator
               + tm_eff * h_tile * (4 + cbytes))            # hidden chunk + recast
        w_traffic = grid_m * (2 * E * H * cbytes + H * 4) + E * 4

    # VMEM limit: sized to the tile plan with headroom, capped below the chip's
    # physical VMEM (never requests 96 MiB on a 64 MiB v7x TensorCore).
    ceiling = max(32 * _MIB, int(0.75 * vmem_cap))
    vmem_limit = int(min(max(int(1.5 * est), 32 * _MIB), ceiling))

    m_exec = grid_m * tm_eff
    cost = pl.CostEstimate(
        flops=4 * m_exec * E * H + 8 * m_exec * H,          # 2 matmuls + GELU elementwise
        transcendentals=m_exec * H,                          # one erf/tanh per hidden elem
        bytes_accessed=(m_exec * E * x_bytes                 # x read
                        + m_exec * E * out_bytes             # out write
                        + w_traffic),                        # weight/bias traffic
    )

    out2d = pl.pallas_call(
        kernel,
        out_shape=jax.ShapeDtypeStruct((M, E), out_dtype),
        grid_spec=pltpu.PrefetchScalarGridSpec(
            num_scalar_prefetch=0,
            grid=grid,
            in_specs=in_specs,
            out_specs=out_specs,
            scratch_shapes=scratch_shapes,
        ),
        compiler_params=pltpu.CompilerParams(
            dimension_semantics=dim_sem,
            vmem_limit_bytes=vmem_limit,
        ),
        cost_estimate=cost,
    )(x2d, w1, b1, w2, b2)

    return out2d.reshape(orig_shape[:-1] + (E,)).astype(out_dtype)


def init_mlp_params(key, embed_dim, hidden_dim, dtype=jnp.float32):
    """Deterministic init matching nn.Linear's U(-1/sqrt(in), 1/sqrt(in))."""
    k1, k2, k3, k4 = jax.random.split(key, 4)
    lim1 = 1.0 / math.sqrt(embed_dim)
    lim2 = 1.0 / math.sqrt(hidden_dim)
    w1 = jax.random.uniform(k1, (embed_dim, hidden_dim), dtype, -lim1, lim1)
    b1 = jax.random.uniform(k2, (hidden_dim,), dtype, -lim1, lim1)
    w2 = jax.random.uniform(k3, (hidden_dim, embed_dim), dtype, -lim2, lim2)
    b2 = jax.random.uniform(k4, (embed_dim,), dtype, -lim2, lim2)
    return w1, b1, w2, b2


def mlp_reference(x, w1, b1, w2, b2):
    h = x @ w1 + b1
    h = 0.5 * h * (1.0 + lax.erf(h / math.sqrt(2.0)))
    return h @ w2 + b2


if __name__ == "__main__":
    key = jax.random.PRNGKey(0)
    kx, kp = jax.random.split(key)

    # 1) Small shapes consistent with the module: batch=2, seq=8, embed=32, hidden=64.
    B, S, E, H = 2, 8, 32, 64
    x = jax.random.normal(kx, (B, S, E), jnp.float32)
    w1, b1, w2, b2 = init_mlp_params(kp, E, H)
    prepped = prepare_mlp_params(w1, b1, w2, b2)   # one-time, outside jit

    run = jax.jit(mlp_pallas)
    out = jax.block_until_ready(run(x, *prepped))
    ref = mlp_reference(x, w1, b1, w2, b2)
    assert out.shape == (B, S, E)
    # bf16 matmul operands (f32 accumulation) -> relaxed tolerance vs f32 ref.
    max_err = float(jnp.max(jnp.abs(out - ref)))
    assert jnp.allclose(out, ref, atol=5e-2, rtol=5e-2), max_err

    # 2) Slightly larger case that exercises the H-tiled accumulator path
    #    (streamed weight slices, f32 accumulator, "arbitrary" H grid axis).
    B2, S2, E2, H2 = 2, 128, 128, 1024
    x2 = jax.random.normal(jax.random.PRNGKey(1), (B2, S2, E2), jnp.float32)
    p2 = init_mlp_params(jax.random.PRNGKey(2), E2, H2)
    prep2 = prepare_mlp_params(*p2)
    run2 = jax.jit(functools.partial(mlp_pallas, h_tile=512))
    out2 = jax.block_until_ready(run2(x2, *prep2))
    ref2 = mlp_reference(x2, *p2)
    assert out2.shape == (B2, S2, E2)
    max_err2 = float(jnp.max(jnp.abs(out2 - ref2)))
    assert jnp.allclose(out2, ref2, atol=5e-2, rtol=5e-2), max_err2

    print("KERNEL_OK")
</pallas_src>

<mosaic_0001>
module attributes {stable_mosaic.version = 11 : i64} {
  func.func @_mlp_fused_kernel(%arg0: i32, %arg1: memref<16x32xf32, #tpu.memory_space<vmem>>, %arg2: memref<32x64xbf16, #tpu.memory_space<vmem>>, %arg3: memref<1x64xf32, #tpu.memory_space<vmem>>, %arg4: memref<64x32xbf16, #tpu.memory_space<vmem>>, %arg5: memref<1x32xf32, #tpu.memory_space<vmem>>, %arg6: memref<16x32xf32, #tpu.memory_space<vmem>>) attributes {dimension_semantics = [#tpu.dimension_semantics<parallel>], iteration_bounds = array<i64: 1>, scalar_prefetch = 0 : i64, scratch_operands = 0 : i64, tpu.core_type = #tpu.core_type<tc>, window_params = [{transform_indices = @transform_0, window_bounds = array<i64: 16, 32>}, {pipeline_mode = #tpu.pipeline_mode<synchronous>, transform_indices = @transform_1, window_bounds = array<i64: 32, 64>}, {pipeline_mode = #tpu.pipeline_mode<synchronous>, transform_indices = @transform_2, window_bounds = array<i64: 1, 64>}, {pipeline_mode = #tpu.pipeline_mode<synchronous>, transform_indices = @transform_3, window_bounds = array<i64: 64, 32>}, {pipeline_mode = #tpu.pipeline_mode<synchronous>, transform_indices = @transform_4, window_bounds = array<i64: 1, 32>}, {transform_indices = @transform_5, window_bounds = array<i64: 16, 32>}]} {
    %c0 = arith.constant 0 : index
    %c0_0 = arith.constant 0 : index
    %0 = vector.load %arg1[%c0, %c0_0] : memref<16x32xf32, #tpu.memory_space<vmem>>, vector<16x32xf32>
    %1 = arith.truncf %0 : vector<16x32xf32> to vector<16x32xbf16>
    %c0_1 = arith.constant 0 : index
    %c0_2 = arith.constant 0 : index
    %2 = vector.load %arg2[%c0_1, %c0_2] : memref<32x64xbf16, #tpu.memory_space<vmem>>, vector<32x64xbf16>
    %cst = arith.constant dense<0.000000e+00> : vector<16x64xf32>
    %3 = tpu.matmul %1, %2, %cst {dimension_numbers = #tpu.dot_dimension_numbers<[1], [0], [0], [1], [0, 0, 1, 1], [], []>} : vector<16x32xbf16>, vector<32x64xbf16>, vector<16x64xf32> -> vector<16x64xf32>
    %c0_3 = arith.constant 0 : index
    %c0_4 = arith.constant 0 : index
    %4 = vector.load %arg3[%c0_3, %c0_4] : memref<1x64xf32, #tpu.memory_space<vmem>>, vector<1x64xf32>
    %5 = vector.broadcast %4 : vector<1x64xf32> to vector<16x64xf32>
    %6 = arith.addf %3, %5 : vector<16x64xf32>
    %cst_5 = arith.constant 5.000000e-01 : f32
    %7 = vector.broadcast %cst_5 : f32 to vector<16x64xf32>
    %8 = arith.mulf %7, %6 : vector<16x64xf32>
    %cst_6 = arith.constant 0.707106769 : f32
    %9 = vector.broadcast %cst_6 : f32 to vector<16x64xf32>
    %10 = arith.mulf %6, %9 : vector<16x64xf32>
    %11 = math.erf %10 : vector<16x64xf32>
    %cst_7 = arith.constant 1.000000e+00 : f32
    %12 = vector.broadcast %cst_7 : f32 to vector<16x64xf32>
    %13 = arith.addf %12, %11 : vector<16x64xf32>
    %14 = arith.mulf %8, %13 : vector<16x64xf32>
    %15 = arith.truncf %14 : vector<16x64xf32> to vector<16x64xbf16>
    %c0_8 = arith.constant 0 : index
    %c0_9 = arith.constant 0 : index
    %16 = vector.load %arg4[%c0_8, %c0_9] : memref<64x32xbf16, #tpu.memory_space<vmem>>, vector<64x32xbf16>
    %cst_10 = arith.constant dense<0.000000e+00> : vector<16x32xf32>
    %17 = tpu.matmul %15, %16, %cst_10 {dimension_numbers = #tpu.dot_dimension_numbers<[1], [0], [0], [1], [0, 0, 1, 1], [], []>} : vector<16x64xbf16>, vector<64x32xbf16>, vector<16x32xf32> -> vector<16x32xf32>
    %c0_11 = arith.constant 0 : index
    %c0_12 = arith.constant 0 : index
    %18 = vector.load %arg5[%c0_11, %c0_12] : memref<1x32xf32, #tpu.memory_space<vmem>>, vector<1x32xf32>
    %19 = vector.broadcast %18 : vector<1x32xf32> to vector<16x32xf32>
    %20 = arith.addf %17, %19 : vector<16x32xf32>
    %c0_13 = arith.constant 0 : index
    %c0_14 = arith.constant 0 : index
    %21 = vector.load %arg6[%c0_13, %c0_14] : memref<16x32xf32, #tpu.memory_space<vmem>>, vector<16x32xf32>
    tpu.vector_store %arg6[%c0_13, %c0_14], %20 {strides = array<i32>} : memref<16x32xf32, #tpu.memory_space<vmem>>, vector<16x32xf32>,
    return
  }
  func.func @transform_0(%arg0: i32) -> (i32, i32) {
    %c0_i32 = arith.constant 0 : i32
    %c0_i32_0 = arith.constant 0 : i32
    return %arg0, %c0_i32 : i32, i32
  }
  func.func @transform_1(%arg0: i32) -> (i32, i32) {
    %c0_i32 = arith.constant 0 : i32
    %c0_i32_0 = arith.constant 0 : i32
    %c0_i32_1 = arith.constant 0 : i32
    return %c0_i32, %c0_i32_0 : i32, i32
  }
  func.func @transform_2(%arg0: i32) -> (i32, i32) {
    %c0_i32 = arith.constant 0 : i32
    %c0_i32_0 = arith.constant 0 : i32
    %c0_i32_1 = arith.constant 0 : i32
    return %c0_i32, %c0_i32_0 : i32, i32
  }
  func.func @transform_3(%arg0: i32) -> (i32, i32) {
    %c0_i32 = arith.constant 0 : i32
    %c0_i32_0 = arith.constant 0 : i32
    %c0_i32_1 = arith.constant 0 : i32
    return %c0_i32, %c0_i32_0 : i32, i32
  }
  func.func @transform_4(%arg0: i32) -> (i32, i32) {
    %c0_i32 = arith.constant 0 : i32
    %c0_i32_0 = arith.constant 0 : i32
    %c0_i32_1 = arith.constant 0 : i32
    return %c0_i32, %c0_i32_0 : i32, i32
  }
  func.func @transform_5(%arg0: i32) -> (i32, i32) {
    %c0_i32 = arith.constant 0 : i32
    %c0_i32_0 = arith.constant 0 : i32
    return %arg0, %c0_i32 : i32, i32
  }
}

</mosaic_0001>

<llo_original>
// kernel: mlp_pallas.1
$region0: #{mlp_pallas.1}
  #allocation0 [shape = 'u32[]', space=smem, size = 0x4, offset = 0x4, fixed_abs, tag = 'smem constant byte address 0x4 - core index']
  #allocation1 [shape = 'u32[144,128]{1,0:T(1,128)}', space=vmem, size = 0x12000, scoped, tag = 'internal scratch']
  %s0 = inlined_call_operand.vmem [shape: f32[16,32], index: 0, kind: input, shape index: {}]
  %s1 = inlined_call_operand.vmem [shape: bf16[32,64], index: 1, kind: input, shape index: {}]
  %s2 = inlined_call_operand.vmem [shape: f32[1,64], index: 2, kind: input, shape index: {}]
  %s3 = inlined_call_operand.vmem [shape: bf16[64,32], index: 3, kind: input, shape index: {}]
  %s4 = inlined_call_operand.vmem [shape: f32[1,32], index: 4, kind: input, shape index: {}]
  %s5 = inlined_call_operand.hbm [shape: f32[16,32], index: 5, kind: output, shape index: {}]
  %s6 = sld [smem:[#allocation0]]
  $region30: #{mlp_pallas.1} parent=0
    _
  %s8 = ssub.s32 1, %s6
  %s9 = scalar_select 0, %s8, %s6
  $region1: #{mlp_pallas.1} parent=0
    #allocation2 [shape = 'u8[8192]{0}', space=vmem, size = 0x2000, scoped, tag = 'output window, operand 0, single buffered']
    #allocation3 [shape = 's32[1]{0}', space=sflag, size = 0x4, scoped, tag = 'scoped memory for mlp_pallas.1']
    %10 = vsyncpa [#allocation3], 0
    // Predicated region
    $region2: #{mlp_pallas.1} parent=1 // pred_check
      _
    $region3: #{mlp_pallas.1} parent=1 // pred_check_branch
      %12 = sbr.rel (0) target = $region5
    $region4: #{mlp_pallas.1} parent=1 // pred_region
      _
    $region5: #{mlp_pallas.1} parent=1 // pred_fallthru
      _
    // Predicated region
    $region6: #{mlp_pallas.1} parent=1 // pred_check
      _
    $region7: #{mlp_pallas.1} parent=1 // pred_check_branch
      %14 = sbr.rel (0) target = $region9
    $region8: #{mlp_pallas.1} parent=1 // pred_region
      _
    $region9: #{mlp_pallas.1} parent=1 // pred_fallthru
      _
    // Predicated region
    $region10: #{mlp_pallas.1} parent=1 // pred_check
      _
    $region11: #{mlp_pallas.1} parent=1 // pred_check_branch
      %16 = sbr.rel (0) target = $region13
    $region12: #{mlp_pallas.1} parent=1 // pred_region
      _
    $region13: #{mlp_pallas.1} parent=1 // pred_fallthru
      _
    // Predicated region
    $region14: #{mlp_pallas.1} parent=1 // pred_check
      _
    $region15: #{mlp_pallas.1} parent=1 // pred_check_branch
      %18 = sbr.rel (0) target = $region17
    $region16: #{mlp_pallas.1} parent=1 // pred_region
      _
    $region17: #{mlp_pallas.1} parent=1 // pred_fallthru
      _
    // Predicated region
    $region18: #{mlp_pallas.1} parent=1 // pred_check
      _
    $region19: #{mlp_pallas.1} parent=1 // pred_check_branch
      %20 = sbr.rel (0) target = $region21
    $region20: #{mlp_pallas.1} parent=1 // pred_region
      _
    $region21: #{mlp_pallas.1} parent=1 // pred_fallthru
      _
    %v22 = vld [vmem:[%s0] sm:$0xff]
    %v23 = vld [vmem:[%s0 + $0x8] sm:$0xff]
    %v24 = vpack.c.bf16 %v23, %v22
    %v25 = vld [vmem:[%s1] sm:$0xf]
    %v26 = vld [vmem:[%s1 + $0x4] sm:$0xf]
    %v27 = vld [vmem:[%s1 + $0x8] sm:$0xf]
    %v28 = vld [vmem:[%s1 + $0xc] sm:$0xf]
    %v29 = vld [vmem:[%s2] sm:$0x1]
    %v31 = vlaneseq
    %v32 = vshrl.u32 %v31, 7
    %v33 = vsub.s32 0, %v32
    %v34 = vrot.slane %v29, %v33
    %v40 = vunpack.c.l.b16 %v25
    %v41 = vunpack.c.l.b16 %v26
    %v42 = vunpack.c.l.b16 %v27
    %v43 = vunpack.c.l.b16 %v28
    %v44 = vpack.c.b16 %v41, %v40
    %v45 = vpack.c.b16 %v43, %v42
    %vm48 = vcmask 261120
    %v50 = vsel %vm48, %v24, 0
    %52 = vmatprep.subr.bf16.mxu0 0
    %53 = vmatpush1.bf16.msra.mxu0 %v44
    %54 = vmatprep.subr.bf16.mxu0 0
    %55 = vmatpush1.bf16.msra.mxu0 %v45
    %56 = vmatprep.subr.bf16.mxu0 0
    %57 = vmatpush1.bf16.msra.mxu0 0
    %58 = vmatprep.subr.bf16.mxu0 0
    %59 = vmatpush1.bf16.msra.mxu0 0
    %60 = vmatprep.subr.bf16.mxu0 0
    %61 = vmatpush1.bf16.msra.mxu0 0
    %62 = vmatprep.subr.bf16.mxu0 0
    %63 = vmatpush1.bf16.msra.mxu0 0
    %64 = vmatprep.subr.bf16.mxu0 0
    %65 = vmatpush1.bf16.msra.mxu0 0
    %66 = vmatprep.subr.bf16.mxu0 0
    %67 = vmatpush1.bf16.msra.mxu0 0
    %68 = vmatprep.subr.bf16.mxu0 0
    %69 = vmatpush1.bf16.msra.mxu0 0
    %70 = vmatprep.subr.bf16.mxu0 0
    %71 = vmatpush1.bf16.msra.mxu0 0
    %72 = vmatprep.subr.bf16.mxu0 0
    %73 = vmatpush1.bf16.msra.mxu0 0
    %74 = vmatprep.subr.bf16.mxu0 0
    %75 = vmatpush1.bf16.msra.mxu0 0
    %76 = vmatprep.subr.bf16.mxu0 0
    %77 = vmatpush1.bf16.msra.mxu0 0
    %78 = vmatprep.subr.bf16.mxu0 0
    %79 = vmatpush1.bf16.msra.mxu0 0
    %80 = vmatprep.subr.bf16.mxu0 0
    %81 = vmatpush1.bf16.msra.mxu0 0
    %82 = vmatprep.subr.bf16.mxu0 0
    %83 = vmatpush1.bf16.msra.mxu0 0
    %84 = vmatprep.mubr.bf16.mxu0 0
    %85 = vmatmul.mubr.bf16.gmra.mrb[0].mxu0 %v50
    %v86 = vpop.f32.mrb[0].mxu0
    %v87 = vadd.f32 %v34, %v86
    %v88 = vpop.f32.mrb[0].mxu0
    %v89 = vpop.f32.mrb[0].mxu0
    %v90 = vadd.f32 %v34, %v89
    %v91 = vpop.f32.mrb[0].mxu0
    %92 = vdwg.mxu0
    %v93 = vmul.f32 %v87, 0.5
    %v94 = vmul.f32 %v90, 0.5
    %v95 = vmul.f32 %v87, 0.70710677
    %v96 = vmul.f32 %v90, 0.70710677
    %v97 = verf.f32.pop %v95
    %v98 = verf.f32.pop %v96
    %v99 = vadd.f32 %v97, 1.0
    %v100 = vadd.f32 %v98, 1.0
    %v101 = vmul.f32 %v93, %v99
    %v102 = vmul.f32 %v94, %v100
    %v103 = vpack.c.bf16 %v102, %v101
    %v104 = vld [vmem:[%s3] sm:$0xf]
    %v105 = vld [vmem:[%s3 + $0x4] sm:$0xf]
    %v106 = vld [vmem:[%s3 + $0x8] sm:$0xf]
    %v107 = vld [vmem:[%s3 + $0xc] sm:$0xf]
    %v108 = vld [vmem:[%s3 + $0x10] sm:$0xf]
    %v109 = vld [vmem:[%s3 + $0x14] sm:$0xf]
    %v110 = vld [vmem:[%s3 + $0x18] sm:$0xf]
    %v111 = vld [vmem:[%s3 + $0x1c] sm:$0xf]
    %v112 = vld [vmem:[%s4] sm:$0x1]
    %v114 = vlaneseq
    %v115 = vshrl.u32 %v114, 7
    %v116 = vsub.s32 0, %v115
    %v117 = vrot.slane %v112, %v116
    %v127 = vunpack.c.l.b16 %v104
    %v128 = vunpack.c.l.b16 %v105
    %v129 = vunpack.c.l.b16 %v106
    %v130 = vunpack.c.l.b16 %v107
    %v131 = vunpack.c.l.b16 %v108
    %v132 = vunpack.c.l.b16 %v109
    %v133 = vunpack.c.l.b16 %v110
    %v134 = vunpack.c.l.b16 %v111
    %v135 = vpack.c.b16 %v128, %v127
    %v136 = vpack.c.b16 %v130, %v129
    %v137 = vpack.c.b16 %v132, %v131
    %v138 = vpack.c.b16 %v134, %v133
    %vm143 = vcmask 523264
    %v145 = vsel %vm143, %v103, 0
    %147 = vmatprep.subr.bf16.mxu0 0
    %148 = vmatpush1.bf16.msra.mxu0 %v135
    %149 = vmatprep.subr.bf16.mxu0 0
    %150 = vmatpush1.bf16.msra.mxu0 %v136
    %151 = vmatprep.subr.bf16.mxu0 0
    %152 = vmatpush1.bf16.msra.mxu0 %v137
    %153 = vmatprep.subr.bf16.mxu0 0
    %154 = vmatpush1.bf16.msra.mxu0 %v138
    %155 = vmatprep.subr.bf16.mxu0 0
    %156 = vmatpush1.bf16.msra.mxu0 0
    %157 = vmatprep.subr.bf16.mxu0 0
    %158 = vmatpush1.bf16.msra.mxu0 0
    %159 = vmatprep.subr.bf16.mxu0 0
    %160 = vmatpush1.bf16.msra.mxu0 0
    %161 = vmatprep.subr.bf16.mxu0 0
    %162 = vmatpush1.bf16.msra.mxu0 0
    %163 = vmatprep.subr.bf16.mxu0 0
    %164 = vmatpush1.bf16.msra.mxu0 0
    %165 = vmatprep.subr.bf16.mxu0 0
    %166 = vmatpush1.bf16.msra.mxu0 0
    %167 = vmatprep.subr.bf16.mxu0 0
    %168 = vmatpush1.bf16.msra.mxu0 0
    %169 = vmatprep.subr.bf16.mxu0 0
    %170 = vmatpush1.bf16.msra.mxu0 0
    %171 = vmatprep.subr.bf16.mxu0 0
    %172 = vmatpush1.bf16.msra.mxu0 0
    %173 = vmatprep.subr.bf16.mxu0 0
    %174 = vmatpush1.bf16.msra.mxu0 0
    %175 = vmatprep.subr.bf16.mxu0 0
    %176 = vmatpush1.bf16.msra.mxu0 0
    %177 = vmatprep.subr.bf16.mxu0 0
    %178 = vmatpush1.bf16.msra.mxu0 0
    %179 = vmatprep.mubr.bf16.mxu0 0
    %180 = vmatmul.mubr.bf16.gmra.mrb[0].mxu0 %v145
    %v181 = vpop.f32.mrb[0].mxu0
    %v182 = vadd.f32 %v117, %v181
    %v183 = vpop.f32.mrb[0].mxu0
    %v184 = vpop.f32.mrb[0].mxu0
    %v185 = vadd.f32 %v117, %v184
    %v186 = vpop.f32.mrb[0].mxu0
    %187 = vdwg.mxu0
    %188 = vst.msk [vmem:[#allocation2] sm:$0xff] %vm48, %v182
    %189 = vst.msk [vmem:[#allocation2 + $0x8] sm:$0xff] %vm48, %v185
    // Predicated region
    $region22: #{mlp_pallas.1} parent=1 // pred_check
      _
    $region23: #{mlp_pallas.1} parent=1 // pred_check_branch
      %191 = sbr.rel (0) target = $region25
    $region24: #{mlp_pallas.1} parent=1 // pred_region
      %s193 = ssub.s32 256, 256
      %194 = vsyncadd [#allocation3], %s193
      %s195 = sshll.u32 [#allocation2], 4
      %s196 = int_to_ptr.vmem [resolvable:$true] %s195
      %201 = dma.vmem_to_hbm [thread:$0]  %s196, 256, %s5, [#allocation3], 128, 128, 8
    $region25: #{mlp_pallas.1} parent=1 // pred_fallthru
      _
    // Predicated region
    $region26: #{mlp_pallas.1} parent=1 // pred_check
      _
    $region27: #{mlp_pallas.1} parent=1 // pred_check_branch
      %203 = sbr.rel (0) target = $region29
    $region28: #{mlp_pallas.1} parent=1 // pred_region
      %204 = dma.done [#allocation3], 256
    $region29: #{mlp_pallas.1} parent=1 // pred_fallthru
      _
    %205 = vsyncpa [#allocation3], 1

</llo_original>
